<compile_context>
chip_gen: v7x
topology: tpu7x:2x2x1
jax: 0.10.0
libtpu: 0.0.40
codegen_flags: <defaults>
</compile_context>

<pallas_src>
import functools

import jax
import jax.numpy as jnp
from jax.experimental import pallas as pl
from jax.experimental.pallas import tpu as pltpu


def _round_up(x: int, m: int) -> int:
    return ((x + m - 1) // m) * m


# ---------------------------------------------------------------------------
# Kernel: d_scaled = d / cutoff ; env = polynomial envelope (p);
#         rbf = exp(-|temps| * (d_scaled - offset)^2) ; out = env[:, None] * rbf
# ---------------------------------------------------------------------------


def _radial_basis_kernel(dc_ref, offset_ref, neg_abs_temps_ref, out_ref, *, exponent):
    # dc_ref: (TE, 2) -- column 0 = d, column 1 = per-edge cutoff
    d = dc_ref[:, 0:1]                                   # (TE, 1)
    c = jnp.maximum(dc_ref[:, 1:2], 1e-12)               # guard div-by-zero (padded edges)
    d_scaled = d / c                                     # (TE, 1)

    # Polynomial envelope (exponent p), Horner form:
    #   env = 1 + dp * (a + d*(b + c*d)),  dp = d^p
    p = exponent
    a = -(p + 1) * (p + 2) / 2.0
    b = float(p * (p + 2))
    cc = -p * (p + 1) / 2.0
    dp = d_scaled ** p                                   # static int pow -> mul chain
    env = 1.0 + dp * (a + d_scaled * (b + cc * d_scaled))
    env = jnp.where(d_scaled < 1.0, env, 0.0)            # (TE, 1)

    # Gaussian basis (temps already negated+abs'd in the wrapper)
    offset = offset_ref[...]                             # (1, Rp)
    neg_abs_temps = neg_abs_temps_ref[...]               # (1, Rp)
    diff = d_scaled - offset                             # (TE, Rp) broadcast
    rbf = jnp.exp(diff * diff * neg_abs_temps)           # (TE, Rp), EUP exp

    out_ref[...] = (env * rbf).astype(out_ref.dtype)     # (TE, Rp)


def radial_basis_pallas(d, cutoff_edge, offset, temps, *, exponent=5,
                        tile_e=1024, out_dtype=jnp.float32):
    """d: (E,) float, cutoff_edge: (E,) float, offset/temps: (R,) float.

    Returns (E, R) out_dtype. Handles arbitrary E and R by padding internally
    (E to a sublane/tile multiple, R to a multiple of 128 for lane-dense stores).
    """
    E = d.shape[0]
    R = offset.shape[0]

    # --- lane-dense output: pad R up to a multiple of 128 -------------------
    R_pad = _round_up(max(R, 1), 128)

    # --- edge tiling: big tile, capped so small problems are a single block --
    tile_e = _round_up(max(8, min(int(tile_e), _round_up(E, 8))), 8)
    E_pad = _round_up(E, tile_e)
    grid = (E_pad // tile_e,)

    # --- pack / pad inputs ---------------------------------------------------
    dc = jnp.stack([d.astype(jnp.float32), cutoff_edge.astype(jnp.float32)], axis=-1)  # (E, 2)
    # pad with 1.0: padded rows get d_scaled = 1 -> env = 0 (and are sliced off anyway)
    dc = jnp.pad(dc, ((0, E_pad - E), (0, 0)), constant_values=1.0)                    # (E_pad, 2)

    off_p = jnp.pad(offset.astype(jnp.float32), (0, R_pad - R)).reshape(1, R_pad)
    nat_p = jnp.pad(-jnp.abs(temps.astype(jnp.float32)), (0, R_pad - R)).reshape(1, R_pad)

    kernel = functools.partial(_radial_basis_kernel, exponent=exponent)

    cost = pl.CostEstimate(
        flops=10 * E_pad * R_pad,
        transcendentals=E_pad * R_pad,
        bytes_accessed=jnp.dtype(out_dtype).itemsize * E_pad * R_pad + 8 * E_pad + 8 * R_pad,
    )

    out_padded = pl.pallas_call(
        kernel,
        out_shape=jax.ShapeDtypeStruct((E_pad, R_pad), out_dtype),
        grid_spec=pltpu.PrefetchScalarGridSpec(
            num_scalar_prefetch=0,
            grid=grid,
            in_specs=[
                pl.BlockSpec((tile_e, 2), lambda i: (i, 0)),      # fused [d | cutoff]
                pl.BlockSpec((1, R_pad), lambda i: (0, 0)),        # offsets (resident)
                pl.BlockSpec((1, R_pad), lambda i: (0, 0)),        # -|temps| (resident)
            ],
            out_specs=pl.BlockSpec((tile_e, R_pad), lambda i: (i, 0)),
        ),
        compiler_params=pltpu.CompilerParams(
            dimension_semantics=("parallel",),
        ),
        cost_estimate=cost,
    )(dc, off_p, nat_p)

    return out_padded[:E, :R]


# ---------------------------------------------------------------------------
# Pure-JAX reference (mirrors the PyTorch module exactly)
# ---------------------------------------------------------------------------


def radial_basis_ref(d, cutoff_edge, offset, temps, exponent=5):
    d_scaled = d / cutoff_edge
    p = exponent
    a = -(p + 1) * (p + 2) / 2.0
    b = p * (p + 2)
    cc = -p * (p + 1) / 2.0
    env = 1.0 + a * d_scaled**p + b * d_scaled ** (p + 1) + cc * d_scaled ** (p + 2)
    env = jnp.where(d_scaled < 1.0, env, jnp.zeros_like(env))
    diff = d_scaled[:, None] - offset[None, :]
    rbf = jnp.exp(diff**2 * -jnp.abs(temps)[None, :])
    return env[:, None] * rbf


if __name__ == "__main__":
    key = jax.random.PRNGKey(0)

    # Small but realistic sizes: R < 128 (exercises lane padding),
    # E not a multiple of 8/128 (exercises edge padding).
    num_radial = 16        # R (padded to 128 lanes inside the wrapper)
    num_edges = 300        # E (arbitrary, no divisibility requirement)
    num_nodes = 32
    num_graphs = 4
    exponent = 5

    k1, k2, k3, k4 = jax.random.split(key, 4)

    # Distances (Angstrom)
    d = jax.random.uniform(k1, (num_edges,), minval=0.1, maxval=7.0, dtype=jnp.float32)

    # Synthetic "data" batch: per-graph dynamic cutoff gathered per edge (glue in JAX,
    # mirrors cutoff[data.batch][edge_index[0]] from the module's relative-cutoff path)
    batch = jax.random.randint(k2, (num_nodes,), 0, num_graphs)                # node -> graph id
    edge_index = jax.random.randint(k3, (2, num_edges), 0, num_nodes)          # (2, E)
    cutoff_per_graph = jax.random.uniform(k4, (num_graphs,), minval=5.0, maxval=8.0,
                                          dtype=jnp.float32)
    cutoff_edge = cutoff_per_graph[batch][edge_index[0]]                       # (E,)

    # Gaussian basis parameters (start=0, stop=1, num_gaussians=num_radial,
    # non-trainable: deterministic init mirroring the PyTorch __init__)
    offset = jnp.linspace(0.0, 1.0, num_radial, dtype=jnp.float32)
    temp = 0.5 / ((1.0 - 0.0) / (num_radial - 1)) ** 2
    temps = jnp.full((num_radial,), temp, dtype=jnp.float32)

    out = radial_basis_pallas(d, cutoff_edge, offset, temps, exponent=exponent)
    out = jax.block_until_ready(out)

    ref = radial_basis_ref(d, cutoff_edge, offset, temps, exponent=exponent)
    assert out.shape == (num_edges, num_radial), out.shape
    assert jnp.allclose(out, ref, atol=1e-5, rtol=1e-5), float(jnp.max(jnp.abs(out - ref)))

    # TODO(synk): scale_basis=True (ScaleFactor) not implemented — it's a learned
    # scalar multiply applied outside the hot path; fold into out_dtype cast if needed.
    print("KERNEL_OK")
</pallas_src>

<mosaic_0001>
module attributes {stable_mosaic.version = 11 : i64} {
  func.func @_radial_basis_kernel(%arg0: i32, %arg1: memref<304x2xf32, #tpu.memory_space<vmem>>, %arg2: memref<1x128xf32, #tpu.memory_space<vmem>>, %arg3: memref<1x128xf32, #tpu.memory_space<vmem>>, %arg4: memref<304x128xf32, #tpu.memory_space<vmem>>) attributes {dimension_semantics = [#tpu.dimension_semantics<parallel>], iteration_bounds = array<i64: 1>, scalar_prefetch = 0 : i64, scratch_operands = 0 : i64, tpu.core_type = #tpu.core_type<tc>, window_params = [{transform_indices = @transform_0, window_bounds = array<i64: 304, 2>}, {pipeline_mode = #tpu.pipeline_mode<synchronous>, transform_indices = @transform_1, window_bounds = array<i64: 1, 128>}, {pipeline_mode = #tpu.pipeline_mode<synchronous>, transform_indices = @transform_2, window_bounds = array<i64: 1, 128>}, {transform_indices = @transform_3, window_bounds = array<i64: 304, 128>}]} {
    %c0 = arith.constant 0 : index
    %c0_0 = arith.constant 0 : index
    %0 = vector.load %arg1[%c0, %c0_0] : memref<304x2xf32, #tpu.memory_space<vmem>>, vector<304x1xf32>
    %c0_1 = arith.constant 0 : index
    %c1 = arith.constant 1 : index
    %1 = vector.load %arg1[%c0_1, %c1] : memref<304x2xf32, #tpu.memory_space<vmem>>, vector<304x1xf32>
    %cst = arith.constant 9.99999996E-13 : f32
    %2 = vector.broadcast %cst : f32 to vector<304x1xf32>
    %3 = arith.maximumf %1, %2 : vector<304x1xf32>
    %4 = arith.divf %0, %3 : vector<304x1xf32>
    %5 = arith.mulf %4, %4 : vector<304x1xf32>
    %6 = arith.mulf %5, %5 : vector<304x1xf32>
    %7 = arith.mulf %4, %6 : vector<304x1xf32>
    %cst_2 = arith.constant -1.500000e+01 : f32
    %8 = vector.broadcast %cst_2 : f32 to vector<304x1xf32>
    %9 = arith.mulf %8, %4 : vector<304x1xf32>
    %cst_3 = arith.constant 3.500000e+01 : f32
    %10 = vector.broadcast %cst_3 : f32 to vector<304x1xf32>
    %11 = arith.addf %10, %9 : vector<304x1xf32>
    %12 = arith.mulf %4, %11 : vector<304x1xf32>
    %cst_4 = arith.constant -2.100000e+01 : f32
    %13 = vector.broadcast %cst_4 : f32 to vector<304x1xf32>
    %14 = arith.addf %13, %12 : vector<304x1xf32>
    %15 = arith.mulf %7, %14 : vector<304x1xf32>
    %cst_5 = arith.constant 1.000000e+00 : f32
    %16 = vector.broadcast %cst_5 : f32 to vector<304x1xf32>
    %17 = arith.addf %16, %15 : vector<304x1xf32>
    %cst_6 = arith.constant 1.000000e+00 : f32
    %18 = vector.broadcast %cst_6 : f32 to vector<304x1xf32>
    %19 = arith.cmpf olt, %4, %18 : vector<304x1xf32>
    %cst_7 = arith.constant 0.000000e+00 : f32
    %20 = vector.broadcast %cst_7 : f32 to vector<304x1xf32>
    %21 = arith.select %19, %17, %20 : vector<304x1xi1>, vector<304x1xf32>
    %c0_8 = arith.constant 0 : index
    %c0_9 = arith.constant 0 : index
    %22 = vector.load %arg2[%c0_8, %c0_9] : memref<1x128xf32, #tpu.memory_space<vmem>>, vector<1x128xf32>
    %c0_10 = arith.constant 0 : index
    %c0_11 = arith.constant 0 : index
    %23 = vector.load %arg3[%c0_10, %c0_11] : memref<1x128xf32, #tpu.memory_space<vmem>>, vector<1x128xf32>
    %24 = vector.broadcast %4 : vector<304x1xf32> to vector<304x128xf32>
    %25 = vector.broadcast %22 : vector<1x128xf32> to vector<304x128xf32>
    %26 = arith.subf %24, %25 : vector<304x128xf32>
    %27 = arith.mulf %26, %26 : vector<304x128xf32>
    %28 = vector.broadcast %23 : vector<1x128xf32> to vector<304x128xf32>
    %29 = arith.mulf %27, %28 : vector<304x128xf32>
    %30 = math.exp %29 : vector<304x128xf32>
    %31 = vector.broadcast %21 : vector<304x1xf32> to vector<304x128xf32>
    %32 = arith.mulf %31, %30 : vector<304x128xf32>
    %c0_12 = arith.constant 0 : index
    %c0_13 = arith.constant 0 : index
    %33 = vector.load %arg4[%c0_12, %c0_13] : memref<304x128xf32, #tpu.memory_space<vmem>>, vector<304x128xf32>
    tpu.vector_store %arg4[%c0_12, %c0_13], %32 {strides = array<i32>} : memref<304x128xf32, #tpu.memory_space<vmem>>, vector<304x128xf32>,
    return
  }
  func.func @transform_0(%arg0: i32) -> (i32, i32) {
    %c0_i32 = arith.constant 0 : i32
    %c0_i32_0 = arith.constant 0 : i32
    return %arg0, %c0_i32 : i32, i32
  }
  func.func @transform_1(%arg0: i32) -> (i32, i32) {
    %c0_i32 = arith.constant 0 : i32
    %c0_i32_0 = arith.constant 0 : i32
    %c0_i32_1 = arith.constant 0 : i32
    return %c0_i32, %c0_i32_0 : i32, i32
  }
  func.func @transform_2(%arg0: i32) -> (i32, i32) {
    %c0_i32 = arith.constant 0 : i32
    %c0_i32_0 = arith.constant 0 : i32
    %c0_i32_1 = arith.constant 0 : i32
    return %c0_i32, %c0_i32_0 : i32, i32
  }
  func.func @transform_3(%arg0: i32) -> (i32, i32) {
    %c0_i32 = arith.constant 0 : i32
    %c0_i32_0 = arith.constant 0 : i32
    return %arg0, %c0_i32 : i32, i32
  }
}

</mosaic_0001>

<llo_original>
// kernel: tpu_custom_call.1
$region0: #{tpu_custom_call.1}
  #allocation0 [shape = 'u32[]', space=smem, size = 0x4, offset = 0x4, fixed_abs, tag = 'smem constant byte address 0x4 - core index']
  #allocation1 [shape = 'u32[144,128]{1,0:T(1,128)}', space=vmem, size = 0x12000, scoped, tag = 'internal scratch']
  %s0 = inlined_call_operand.vmem [shape: f32[304,2], index: 0, kind: input, shape index: {}]
  %s1 = inlined_call_operand.vmem [shape: f32[1,128], index: 1, kind: input, shape index: {}]
  %s2 = inlined_call_operand.vmem [shape: f32[1,128], index: 2, kind: input, shape index: {}]
  %s3 = inlined_call_operand.hbm [shape: f32[304,128], index: 3, kind: output, shape index: {}]
  %s4 = sld [smem:[#allocation0]]
  $region22: #{tpu_custom_call.1} parent=0
    _
  %s6 = ssub.s32 1, %s4
  %s7 = scalar_select 0, %s6, %s4
  $region1: #{tpu_custom_call.1} parent=0
    #allocation2 [shape = 'u8[155648]{0}', space=vmem, size = 0x26000, scoped, tag = 'output window, operand 0, single buffered']
    #allocation3 [shape = 's32[1]{0}', space=sflag, size = 0x4, scoped, tag = 'scoped memory for tpu_custom_call.1']
    %8 = vsyncpa [#allocation3], 0
    // Predicated region
    $region2: #{tpu_custom_call.1} parent=1 // pred_check
      _
    $region3: #{tpu_custom_call.1} parent=1 // pred_check_branch
      %10 = sbr.rel (0) target = $region5
    $region4: #{tpu_custom_call.1} parent=1 // pred_region
      _
    $region5: #{tpu_custom_call.1} parent=1 // pred_fallthru
      _
    // Predicated region
    $region6: #{tpu_custom_call.1} parent=1 // pred_check
      _
    $region7: #{tpu_custom_call.1} parent=1 // pred_check_branch
      %12 = sbr.rel (0) target = $region9
    $region8: #{tpu_custom_call.1} parent=1 // pred_region
      _
    $region9: #{tpu_custom_call.1} parent=1 // pred_fallthru
      _
    // Predicated region
    $region10: #{tpu_custom_call.1} parent=1 // pred_check
      _
    $region11: #{tpu_custom_call.1} parent=1 // pred_check_branch
      %14 = sbr.rel (0) target = $region13
    $region12: #{tpu_custom_call.1} parent=1 // pred_region
      _
    $region13: #{tpu_custom_call.1} parent=1 // pred_fallthru
      _
    %v15 = vld [vmem:[%s0] sm:$0xff]
    %v16 = vld [vmem:[%s0 + $0x8] sm:$0xff]
    %v17 = vld [vmem:[%s0 + $0x10] sm:$0xff]
    %v18 = vld [vmem:[%s0 + $0x18] sm:$0xff]
    %v19 = vld [vmem:[%s0 + $0x20] sm:$0xff]
    %v20 = vld [vmem:[%s0 + $0x28] sm:$0xff]
    %v21 = vld [vmem:[%s0 + $0x30] sm:$0xff]
    %v22 = vld [vmem:[%s0 + $0x38] sm:$0xff]
    %v23 = vld [vmem:[%s0 + $0x40] sm:$0xff]
    %v24 = vld [vmem:[%s0 + $0x48] sm:$0xff]
    %v25 = vld [vmem:[%s0 + $0x50] sm:$0xff]
    %v26 = vld [vmem:[%s0 + $0x58] sm:$0xff]
    %v27 = vld [vmem:[%s0 + $0x60] sm:$0xff]
    %v28 = vld [vmem:[%s0 + $0x68] sm:$0xff]
    %v29 = vld [vmem:[%s0 + $0x70] sm:$0xff]
    %v30 = vld [vmem:[%s0 + $0x78] sm:$0xff]
    %v31 = vld [vmem:[%s0 + $0x80] sm:$0xff]
    %v32 = vld [vmem:[%s0 + $0x88] sm:$0xff]
    %v33 = vld [vmem:[%s0 + $0x90] sm:$0xff]
    %v34 = vld [vmem:[%s0 + $0x98] sm:$0xff]
    %v35 = vld [vmem:[%s0 + $0xa0] sm:$0xff]
    %v36 = vld [vmem:[%s0 + $0xa8] sm:$0xff]
    %v37 = vld [vmem:[%s0 + $0xb0] sm:$0xff]
    %v38 = vld [vmem:[%s0 + $0xb8] sm:$0xff]
    %v39 = vld [vmem:[%s0 + $0xc0] sm:$0xff]
    %v40 = vld [vmem:[%s0 + $0xc8] sm:$0xff]
    %v41 = vld [vmem:[%s0 + $0xd0] sm:$0xff]
    %v42 = vld [vmem:[%s0 + $0xd8] sm:$0xff]
    %v43 = vld [vmem:[%s0 + $0xe0] sm:$0xff]
    %v44 = vld [vmem:[%s0 + $0xe8] sm:$0xff]
    %v45 = vld [vmem:[%s0 + $0xf0] sm:$0xff]
    %v46 = vld [vmem:[%s0 + $0xf8] sm:$0xff]
    %v47 = vld [vmem:[%s0 + $0x100] sm:$0xff]
    %v48 = vld [vmem:[%s0 + $0x108] sm:$0xff]
    %v49 = vld [vmem:[%s0 + $0x110] sm:$0xff]
    %v50 = vld [vmem:[%s0 + $0x118] sm:$0xff]
    %v51 = vld [vmem:[%s0 + $0x120] sm:$0xff]
    %v52 = vld [vmem:[%s0 + $0x128] sm:$0xff]
    %v53 = vmax.f32 %v15, 1e-12
    %v54 = vmax.f32 %v16, 1e-12
    %v55 = vmax.f32 %v17, 1e-12
    %v56 = vmax.f32 %v18, 1e-12
    %v57 = vmax.f32 %v19, 1e-12
    %v58 = vmax.f32 %v20, 1e-12
    %v59 = vmax.f32 %v21, 1e-12
    %v60 = vmax.f32 %v22, 1e-12
    %v61 = vmax.f32 %v23, 1e-12
    %v62 = vmax.f32 %v24, 1e-12
    %v63 = vmax.f32 %v25, 1e-12
    %v64 = vmax.f32 %v26, 1e-12
    %v65 = vmax.f32 %v27, 1e-12
    %v66 = vmax.f32 %v28, 1e-12
    %v67 = vmax.f32 %v29, 1e-12
    %v68 = vmax.f32 %v30, 1e-12
    %v69 = vmax.f32 %v31, 1e-12
    %v70 = vmax.f32 %v32, 1e-12
    %v71 = vmax.f32 %v33, 1e-12
    %v72 = vmax.f32 %v34, 1e-12
    %v73 = vmax.f32 %v35, 1e-12
    %v74 = vmax.f32 %v36, 1e-12
    %v75 = vmax.f32 %v37, 1e-12
    %v76 = vmax.f32 %v38, 1e-12
    %v77 = vmax.f32 %v39, 1e-12
    %v78 = vmax.f32 %v40, 1e-12
    %v79 = vmax.f32 %v41, 1e-12
    %v80 = vmax.f32 %v42, 1e-12
    %v81 = vmax.f32 %v43, 1e-12
    %v82 = vmax.f32 %v44, 1e-12
    %v83 = vmax.f32 %v45, 1e-12
    %v84 = vmax.f32 %v46, 1e-12
    %v85 = vmax.f32 %v47, 1e-12
    %v86 = vmax.f32 %v48, 1e-12
    %v87 = vmax.f32 %v49, 1e-12
    %v88 = vmax.f32 %v50, 1e-12
    %v89 = vmax.f32 %v51, 1e-12
    %v90 = vmax.f32 %v52, 1e-12
    %129 = vrot.lane.b32.xlu0 %v53, 127
    %v130 = vpop.permute.xlu0 %129
    %131 = vrot.lane.b32.xlu0 %v54, 127
    %v132 = vpop.permute.xlu0 %131
    %133 = vrot.lane.b32.xlu0 %v55, 127
    %v134 = vpop.permute.xlu0 %133
    %135 = vrot.lane.b32.xlu0 %v56, 127
    %v136 = vpop.permute.xlu0 %135
    %137 = vrot.lane.b32.xlu0 %v57, 127
    %v138 = vpop.permute.xlu0 %137
    %139 = vrot.lane.b32.xlu0 %v58, 127
    %v140 = vpop.permute.xlu0 %139
    %141 = vrot.lane.b32.xlu0 %v59, 127
    %v142 = vpop.permute.xlu0 %141
    %143 = vrot.lane.b32.xlu0 %v60, 127
    %v144 = vpop.permute.xlu0 %143
    %145 = vrot.lane.b32.xlu0 %v61, 127
    %v146 = vpop.permute.xlu0 %145
    %147 = vrot.lane.b32.xlu0 %v62, 127
    %v148 = vpop.permute.xlu0 %147
    %149 = vrot.lane.b32.xlu0 %v63, 127
    %v150 = vpop.permute.xlu0 %149
    %151 = vrot.lane.b32.xlu0 %v64, 127
    %v152 = vpop.permute.xlu0 %151
    %153 = vrot.lane.b32.xlu0 %v65, 127
    %v154 = vpop.permute.xlu0 %153
    %155 = vrot.lane.b32.xlu0 %v66, 127
    %v156 = vpop.permute.xlu0 %155
    %157 = vrot.lane.b32.xlu0 %v67, 127
    %v158 = vpop.permute.xlu0 %157
    %159 = vrot.lane.b32.xlu0 %v68, 127
    %v160 = vpop.permute.xlu0 %159
    %161 = vrot.lane.b32.xlu0 %v69, 127
    %v162 = vpop.permute.xlu0 %161
    %163 = vrot.lane.b32.xlu0 %v70, 127
    %v164 = vpop.permute.xlu0 %163
    %165 = vrot.lane.b32.xlu0 %v71, 127
    %v166 = vpop.permute.xlu0 %165
    %167 = vrot.lane.b32.xlu0 %v72, 127
    %v168 = vpop.permute.xlu0 %167
    %169 = vrot.lane.b32.xlu0 %v73, 127
    %v170 = vpop.permute.xlu0 %169
    %171 = vrot.lane.b32.xlu0 %v74, 127
    %v172 = vpop.permute.xlu0 %171
    %173 = vrot.lane.b32.xlu0 %v75, 127
    %v174 = vpop.permute.xlu0 %173
    %175 = vrot.lane.b32.xlu0 %v76, 127
    %v176 = vpop.permute.xlu0 %175
    %177 = vrot.lane.b32.xlu0 %v77, 127
    %v178 = vpop.permute.xlu0 %177
    %179 = vrot.lane.b32.xlu0 %v78, 127
    %v180 = vpop.permute.xlu0 %179
    %181 = vrot.lane.b32.xlu0 %v79, 127
    %v182 = vpop.permute.xlu0 %181
    %183 = vrot.lane.b32.xlu0 %v80, 127
    %v184 = vpop.permute.xlu0 %183
    %185 = vrot.lane.b32.xlu0 %v81, 127
    %v186 = vpop.permute.xlu0 %185
    %187 = vrot.lane.b32.xlu0 %v82, 127
    %v188 = vpop.permute.xlu0 %187
    %189 = vrot.lane.b32.xlu0 %v83, 127
    %v190 = vpop.permute.xlu0 %189
    %191 = vrot.lane.b32.xlu0 %v84, 127
    %v192 = vpop.permute.xlu0 %191
    %193 = vrot.lane.b32.xlu0 %v85, 127
    %v194 = vpop.permute.xlu0 %193
    %195 = vrot.lane.b32.xlu0 %v86, 127
    %v196 = vpop.permute.xlu0 %195
    %197 = vrot.lane.b32.xlu0 %v87, 127
    %v198 = vpop.permute.xlu0 %197
    %199 = vrot.lane.b32.xlu0 %v88, 127
    %v200 = vpop.permute.xlu0 %199
    %201 = vrot.lane.b32.xlu0 %v89, 127
    %v202 = vpop.permute.xlu0 %201
    %203 = vrot.lane.b32.xlu0 %v90, 127
    %v204 = vpop.permute.xlu0 %203
    %v243 = vrcp.pop %v130
    %v244 = vmul.f32 %v15, %v243
    %v245 = vrcp.pop %v132
    %v246 = vmul.f32 %v16, %v245
    %v247 = vrcp.pop %v134
    %v248 = vmul.f32 %v17, %v247
    %v249 = vrcp.pop %v136
    %v250 = vmul.f32 %v18, %v249
    %v251 = vrcp.pop %v138
    %v252 = vmul.f32 %v19, %v251
    %v253 = vrcp.pop %v140
    %v254 = vmul.f32 %v20, %v253
    %v255 = vrcp.pop %v142
    %v256 = vmul.f32 %v21, %v255
    %v257 = vrcp.pop %v144
    %v258 = vmul.f32 %v22, %v257
    %v259 = vrcp.pop %v146
    %v260 = vmul.f32 %v23, %v259
    %v261 = vrcp.pop %v148
    %v262 = vmul.f32 %v24, %v261
    %v263 = vrcp.pop %v150
    %v264 = vmul.f32 %v25, %v263
    %v265 = vrcp.pop %v152
    %v266 = vmul.f32 %v26, %v265
    %v267 = vrcp.pop %v154
    %v268 = vmul.f32 %v27, %v267
    %v269 = vrcp.pop %v156
    %v270 = vmul.f32 %v28, %v269
    %v271 = vrcp.pop %v158
    %v272 = vmul.f32 %v29, %v271
    %v273 = vrcp.pop %v160
    %v274 = vmul.f32 %v30, %v273
    %v275 = vrcp.pop %v162
    %v276 = vmul.f32 %v31, %v275
    %v277 = vrcp.pop %v164
    %v278 = vmul.f32 %v32, %v277
    %v279 = vrcp.pop %v166
    %v280 = vmul.f32 %v33, %v279
    %v281 = vrcp.pop %v168
    %v282 = vmul.f32 %v34, %v281
    %v283 = vrcp.pop %v170
    %v284 = vmul.f32 %v35, %v283
    %v285 = vrcp.pop %v172
    %v286 = vmul.f32 %v36, %v285
    %v287 = vrcp.pop %v174
    %v288 = vmul.f32 %v37, %v287
    %v289 = vrcp.pop %v176
    %v290 = vmul.f32 %v38, %v289
    %v291 = vrcp.pop %v178
    %v292 = vmul.f32 %v39, %v291
    %v293 = vrcp.pop %v180
    %v294 = vmul.f32 %v40, %v293
    %v295 = vrcp.pop %v182
    %v296 = vmul.f32 %v41, %v295
    %v297 = vrcp.pop %v184
    %v298 = vmul.f32 %v42, %v297
    %v299 = vrcp.pop %v186
    %v300 = vmul.f32 %v43, %v299
    %v301 = vrcp.pop %v188
    %v302 = vmul.f32 %v44, %v301
    %v303 = vrcp.pop %v190
    %v304 = vmul.f32 %v45, %v303
    %v305 = vrcp.pop %v192
    %v306 = vmul.f32 %v46, %v305
    %v307 = vrcp.pop %v194
    %v308 = vmul.f32 %v47, %v307
    %v309 = vrcp.pop %v196
    %v310 = vmul.f32 %v48, %v309
    %v311 = vrcp.pop %v198
    %v312 = vmul.f32 %v49, %v311
    %v313 = vrcp.pop %v200
    %v314 = vmul.f32 %v50, %v313
    %v315 = vrcp.pop %v202
    %v316 = vmul.f32 %v51, %v315
    %v317 = vrcp.pop %v204
    %v318 = vmul.f32 %v52, %v317
    %v319 = vmul.f32 %v244, %v244
    %v320 = vmul.f32 %v246, %v246
    %v321 = vmul.f32 %v248, %v248
    %v322 = vmul.f32 %v250, %v250
    %v323 = vmul.f32 %v252, %v252
    %v324 = vmul.f32 %v254, %v254
    %v325 = vmul.f32 %v256, %v256
    %v326 = vmul.f32 %v258, %v258
    %v327 = vmul.f32 %v260, %v260
    %v328 = vmul.f32 %v262, %v262
    %v329 = vmul.f32 %v264, %v264
    %v330 = vmul.f32 %v266, %v266
    %v331 = vmul.f32 %v268, %v268
    %v332 = vmul.f32 %v270, %v270
    %v333 = vmul.f32 %v272, %v272
    %v334 = vmul.f32 %v274, %v274
    %v335 = vmul.f32 %v276, %v276
    %v336 = vmul.f32 %v278, %v278
    %v337 = vmul.f32 %v280, %v280
    %v338 = vmul.f32 %v282, %v282
    %v339 = vmul.f32 %v284, %v284
    %v340 = vmul.f32 %v286, %v286
    %v341 = vmul.f32 %v288, %v288
    %v342 = vmul.f32 %v290, %v290
    %v343 = vmul.f32 %v292, %v292
    %v344 = vmul.f32 %v294, %v294
    %v345 = vmul.f32 %v296, %v296
    %v346 = vmul.f32 %v298, %v298
    %v347 = vmul.f32 %v300, %v300
    %v348 = vmul.f32 %v302, %v302
    %v349 = vmul.f32 %v304, %v304
    %v350 = vmul.f32 %v306, %v306
    %v351 = vmul.f32 %v308, %v308
    %v352 = vmul.f32 %v310, %v310
    %v353 = vmul.f32 %v312, %v312
    %v354 = vmul.f32 %v314, %v314
    %v355 = vmul.f32 %v316, %v316
    %v356 = vmul.f32 %v318, %v318
    %v357 = vmul.f32 %v319, %v319
    %v358 = vmul.f32 %v320, %v320
    %v359 = vmul.f32 %v321, %v321
    %v360 = vmul.f32 %v322, %v322
    %v361 = vmul.f32 %v323, %v323
    %v362 = vmul.f32 %v324, %v324
    %v363 = vmul.f32 %v325, %v325
    %v364 = vmul.f32 %v326, %v326
    %v365 = vmul.f32 %v327, %v327
    %v366 = vmul.f32 %v328, %v328
    %v367 = vmul.f32 %v329, %v329
    %v368 = vmul.f32 %v330, %v330
    %v369 = vmul.f32 %v331, %v331
    %v370 = vmul.f32 %v332, %v332
    %v371 = vmul.f32 %v333, %v333
    %v372 = vmul.f32 %v334, %v334
    %v373 = vmul.f32 %v335, %v335
    %v374 = vmul.f32 %v336, %v336
    %v375 = vmul.f32 %v337, %v337
    %v376 = vmul.f32 %v338, %v338
    %v377 = vmul.f32 %v339, %v339
    %v378 = vmul.f32 %v340, %v340
    %v379 = vmul.f32 %v341, %v341
    %v380 = vmul.f32 %v342, %v342
    %v381 = vmul.f32 %v343, %v343
    %v382 = vmul.f32 %v344, %v344
    %v383 = vmul.f32 %v345, %v345
    %v384 = vmul.f32 %v346, %v346
    %v385 = vmul.f32 %v347, %v347
    %v386 = vmul.f32 %v348, %v348
    %v387 = vmul.f32 %v349, %v349
    %v388 = vmul.f32 %v350, %v350
    %v389 = vmul.f32 %v351, %v351
    %v390 = vmul.f32 %v352, %v352
    %v391 = vmul.f32 %v353, %v353
    %v392 = vmul.f32 %v354, %v354
    %v393 = vmul.f32 %v355, %v355
    %v394 = vmul.f32 %v356, %v356
    %v395 = vmul.f32 %v244, %v357
    %v396 = vmul.f32 %v246, %v358
    %v397 = vmul.f32 %v248, %v359
    %v398 = vmul.f32 %v250, %v360
    %v399 = vmul.f32 %v252, %v361
    %v400 = vmul.f32 %v254, %v362
    %v401 = vmul.f32 %v256, %v363
    %v402 = vmul.f32 %v258, %v364
    %v403 = vmul.f32 %v260, %v365
    %v404 = vmul.f32 %v262, %v366
    %v405 = vmul.f32 %v264, %v367
    %v406 = vmul.f32 %v266, %v368
    %v407 = vmul.f32 %v268, %v369
    %v408 = vmul.f32 %v270, %v370
    %v409 = vmul.f32 %v272, %v371
    %v410 = vmul.f32 %v274, %v372
    %v411 = vmul.f32 %v276, %v373
    %v412 = vmul.f32 %v278, %v374
    %v413 = vmul.f32 %v280, %v375
    %v414 = vmul.f32 %v282, %v376
    %v415 = vmul.f32 %v284, %v377
    %v416 = vmul.f32 %v286, %v378
    %v417 = vmul.f32 %v288, %v379
    %v418 = vmul.f32 %v290, %v380
    %v419 = vmul.f32 %v292, %v381
    %v420 = vmul.f32 %v294, %v382
    %v421 = vmul.f32 %v296, %v383
    %v422 = vmul.f32 %v298, %v384
    %v423 = vmul.f32 %v300, %v385
    %v424 = vmul.f32 %v302, %v386
    %v425 = vmul.f32 %v304, %v387
    %v426 = vmul.f32 %v306, %v388
    %v427 = vmul.f32 %v308, %v389
    %v428 = vmul.f32 %v310, %v390
    %v429 = vmul.f32 %v312, %v391
    %v430 = vmul.f32 %v314, %v392
    %v431 = vmul.f32 %v316, %v393
    %v432 = vmul.f32 %v318, %v394
    %v433 = vmul.f32 %v244, -15.0
    %v434 = vmul.f32 %v246, -15.0
    %v435 = vmul.f32 %v248, -15.0
    %v436 = vmul.f32 %v250, -15.0
    %v437 = vmul.f32 %v252, -15.0
    %v438 = vmul.f32 %v254, -15.0
    %v439 = vmul.f32 %v256, -15.0
    %v440 = vmul.f32 %v258, -15.0
    %v441 = vmul.f32 %v260, -15.0
    %v442 = vmul.f32 %v262, -15.0
    %v443 = vmul.f32 %v264, -15.0
    %v444 = vmul.f32 %v266, -15.0
    %v445 = vmul.f32 %v268, -15.0
    %v446 = vmul.f32 %v270, -15.0
    %v447 = vmul.f32 %v272, -15.0
    %v448 = vmul.f32 %v274, -15.0
    %v449 = vmul.f32 %v276, -15.0
    %v450 = vmul.f32 %v278, -15.0
    %v451 = vmul.f32 %v280, -15.0
    %v452 = vmul.f32 %v282, -15.0
    %v453 = vmul.f32 %v284, -15.0
    %v454 = vmul.f32 %v286, -15.0
    %v455 = vmul.f32 %v288, -15.0
    %v456 = vmul.f32 %v290, -15.0
    %v457 = vmul.f32 %v292, -15.0
    %v458 = vmul.f32 %v294, -15.0
    %v459 = vmul.f32 %v296, -15.0
    %v460 = vmul.f32 %v298, -15.0
    %v461 = vmul.f32 %v300, -15.0
    %v462 = vmul.f32 %v302, -15.0
    %v463 = vmul.f32 %v304, -15.0
    %v464 = vmul.f32 %v306, -15.0
    %v465 = vmul.f32 %v308, -15.0
    %v466 = vmul.f32 %v310, -15.0
    %v467 = vmul.f32 %v312, -15.0
    %v468 = vmul.f32 %v314, -15.0
    %v469 = vmul.f32 %v316, -15.0
    %v470 = vmul.f32 %v318, -15.0
    %v471 = vadd.f32 %v433, 35.0
    %v472 = vadd.f32 %v434, 35.0
    %v473 = vadd.f32 %v435, 35.0
    %v474 = vadd.f32 %v436, 35.0
    %v475 = vadd.f32 %v437, 35.0
    %v476 = vadd.f32 %v438, 35.0
    %v477 = vadd.f32 %v439, 35.0
    %v478 = vadd.f32 %v440, 35.0
    %v479 = vadd.f32 %v441, 35.0
    %v480 = vadd.f32 %v442, 35.0
    %v481 = vadd.f32 %v443, 35.0
    %v482 = vadd.f32 %v444, 35.0
    %v483 = vadd.f32 %v445, 35.0
    %v484 = vadd.f32 %v446, 35.0
    %v485 = vadd.f32 %v447, 35.0
    %v486 = vadd.f32 %v448, 35.0
    %v487 = vadd.f32 %v449, 35.0
    %v488 = vadd.f32 %v450, 35.0
    %v489 = vadd.f32 %v451, 35.0
    %v490 = vadd.f32 %v452, 35.0
    %v491 = vadd.f32 %v453, 35.0
    %v492 = vadd.f32 %v454, 35.0
    %v493 = vadd.f32 %v455, 35.0
    %v494 = vadd.f32 %v456, 35.0
    %v495 = vadd.f32 %v457, 35.0
    %v496 = vadd.f32 %v458, 35.0
    %v497 = vadd.f32 %v459, 35.0
    %v498 = vadd.f32 %v460, 35.0
    %v499 = vadd.f32 %v461, 35.0
    %v500 = vadd.f32 %v462, 35.0
    %v501 = vadd.f32 %v463, 35.0
    %v502 = vadd.f32 %v464, 35.0
    %v503 = vadd.f32 %v465, 35.0
    %v504 = vadd.f32 %v466, 35.0
    %v505 = vadd.f32 %v467, 35.0
    %v506 = vadd.f32 %v468, 35.0
    %v507 = vadd.f32 %v469, 35.0
    %v508 = vadd.f32 %v470, 35.0
    %v509 = vmul.f32 %v244, %v471
    %v510 = vmul.f32 %v246, %v472
    %v511 = vmul.f32 %v248, %v473
    %v512 = vmul.f32 %v250, %v474
    %v513 = vmul.f32 %v252, %v475
    %v514 = vmul.f32 %v254, %v476
    %v515 = vmul.f32 %v256, %v477
    %v516 = vmul.f32 %v258, %v478
    %v517 = vmul.f32 %v260, %v479
    %v518 = vmul.f32 %v262, %v480
    %v519 = vmul.f32 %v264, %v481
    %v520 = vmul.f32 %v266, %v482
    %v521 = vmul.f32 %v268, %v483
    %v522 = vmul.f32 %v270, %v484
    %v523 = vmul.f32 %v272, %v485
    %v524 = vmul.f32 %v274, %v486
    %v525 = vmul.f32 %v276, %v487
    %v526 = vmul.f32 %v278, %v488
    %v527 = vmul.f32 %v280, %v489
    %v528 = vmul.f32 %v282, %v490
    %v529 = vmul.f32 %v284, %v491
    %v530 = vmul.f32 %v286, %v492
    %v531 = vmul.f32 %v288, %v493
    %v532 = vmul.f32 %v290, %v494
    %v533 = vmul.f32 %v292, %v495
    %v534 = vmul.f32 %v294, %v496
    %v535 = vmul.f32 %v296, %v497
    %v536 = vmul.f32 %v298, %v498
    %v537 = vmul.f32 %v300, %v499
    %v538 = vmul.f32 %v302, %v500
    %v539 = vmul.f32 %v304, %v501
    %v540 = vmul.f32 %v306, %v502
    %v541 = vmul.f32 %v308, %v503
    %v542 = vmul.f32 %v310, %v504
    %v543 = vmul.f32 %v312, %v505
    %v544 = vmul.f32 %v314, %v506
    %v545 = vmul.f32 %v316, %v507
    %v546 = vmul.f32 %v318, %v508
    %v547 = vadd.f32 %v509, -21.0
    %v548 = vadd.f32 %v510, -21.0
    %v549 = vadd.f32 %v511, -21.0
    %v550 = vadd.f32 %v512, -21.0
    %v551 = vadd.f32 %v513, -21.0
    %v552 = vadd.f32 %v514, -21.0
    %v553 = vadd.f32 %v515, -21.0
    %v554 = vadd.f32 %v516, -21.0
    %v555 = vadd.f32 %v517, -21.0
    %v556 = vadd.f32 %v518, -21.0
    %v557 = vadd.f32 %v519, -21.0
    %v558 = vadd.f32 %v520, -21.0
    %v559 = vadd.f32 %v521, -21.0
    %v560 = vadd.f32 %v522, -21.0
    %v561 = vadd.f32 %v523, -21.0
    %v562 = vadd.f32 %v524, -21.0
    %v563 = vadd.f32 %v525, -21.0
    %v564 = vadd.f32 %v526, -21.0
    %v565 = vadd.f32 %v527, -21.0
    %v566 = vadd.f32 %v528, -21.0
    %v567 = vadd.f32 %v529, -21.0
    %v568 = vadd.f32 %v530, -21.0
    %v569 = vadd.f32 %v531, -21.0
    %v570 = vadd.f32 %v532, -21.0
    %v571 = vadd.f32 %v533, -21.0
    %v572 = vadd.f32 %v534, -21.0
    %v573 = vadd.f32 %v535, -21.0
    %v574 = vadd.f32 %v536, -21.0
    %v575 = vadd.f32 %v537, -21.0
    %v576 = vadd.f32 %v538, -21.0
    %v577 = vadd.f32 %v539, -21.0
    %v578 = vadd.f32 %v540, -21.0
    %v579 = vadd.f32 %v541, -21.0
    %v580 = vadd.f32 %v542, -21.0
    %v581 = vadd.f32 %v543, -21.0
    %v582 = vadd.f32 %v544, -21.0
    %v583 = vadd.f32 %v545, -21.0
    %v584 = vadd.f32 %v546, -21.0
    %v585 = vmul.f32 %v395, %v547
    %v586 = vmul.f32 %v396, %v548
    %v587 = vmul.f32 %v397, %v549
    %v588 = vmul.f32 %v398, %v550
    %v589 = vmul.f32 %v399, %v551
    %v590 = vmul.f32 %v400, %v552
    %v591 = vmul.f32 %v401, %v553
    %v592 = vmul.f32 %v402, %v554
    %v593 = vmul.f32 %v403, %v555
    %v594 = vmul.f32 %v404, %v556
    %v595 = vmul.f32 %v405, %v557
    %v596 = vmul.f32 %v406, %v558
    %v597 = vmul.f32 %v407, %v559
    %v598 = vmul.f32 %v408, %v560
    %v599 = vmul.f32 %v409, %v561
    %v600 = vmul.f32 %v410, %v562
    %v601 = vmul.f32 %v411, %v563
    %v602 = vmul.f32 %v412, %v564
    %v603 = vmul.f32 %v413, %v565
    %v604 = vmul.f32 %v414, %v566
    %v605 = vmul.f32 %v415, %v567
    %v606 = vmul.f32 %v416, %v568
    %v607 = vmul.f32 %v417, %v569
    %v608 = vmul.f32 %v418, %v570
    %v609 = vmul.f32 %v419, %v571
    %v610 = vmul.f32 %v420, %v572
    %v611 = vmul.f32 %v421, %v573
    %v612 = vmul.f32 %v422, %v574
    %v613 = vmul.f32 %v423, %v575
    %v614 = vmul.f32 %v424, %v576
    %v615 = vmul.f32 %v425, %v577
    %v616 = vmul.f32 %v426, %v578
    %v617 = vmul.f32 %v427, %v579
    %v618 = vmul.f32 %v428, %v580
    %v619 = vmul.f32 %v429, %v581
    %v620 = vmul.f32 %v430, %v582
    %v621 = vmul.f32 %v431, %v583
    %v622 = vmul.f32 %v432, %v584
    %v623 = vadd.f32 %v585, 1.0
    %v624 = vadd.f32 %v586, 1.0
    %v625 = vadd.f32 %v587, 1.0
    %v626 = vadd.f32 %v588, 1.0
    %v627 = vadd.f32 %v589, 1.0
    %v628 = vadd.f32 %v590, 1.0
    %v629 = vadd.f32 %v591, 1.0
    %v630 = vadd.f32 %v592, 1.0
    %v631 = vadd.f32 %v593, 1.0
    %v632 = vadd.f32 %v594, 1.0
    %v633 = vadd.f32 %v595, 1.0
    %v634 = vadd.f32 %v596, 1.0
    %v635 = vadd.f32 %v597, 1.0
    %v636 = vadd.f32 %v598, 1.0
    %v637 = vadd.f32 %v599, 1.0
    %v638 = vadd.f32 %v600, 1.0
    %v639 = vadd.f32 %v601, 1.0
    %v640 = vadd.f32 %v602, 1.0
    %v641 = vadd.f32 %v603, 1.0
    %v642 = vadd.f32 %v604, 1.0
    %v643 = vadd.f32 %v605, 1.0
    %v644 = vadd.f32 %v606, 1.0
    %v645 = vadd.f32 %v607, 1.0
    %v646 = vadd.f32 %v608, 1.0
    %v647 = vadd.f32 %v609, 1.0
    %v648 = vadd.f32 %v610, 1.0
    %v649 = vadd.f32 %v611, 1.0
    %v650 = vadd.f32 %v612, 1.0
    %v651 = vadd.f32 %v613, 1.0
    %v652 = vadd.f32 %v614, 1.0
    %v653 = vadd.f32 %v615, 1.0
    %v654 = vadd.f32 %v616, 1.0
    %v655 = vadd.f32 %v617, 1.0
    %v656 = vadd.f32 %v618, 1.0
    %v657 = vadd.f32 %v619, 1.0
    %v658 = vadd.f32 %v620, 1.0
    %v659 = vadd.f32 %v621, 1.0
    %v660 = vadd.f32 %v622, 1.0
    %vm661 = vcmp.lt.f32.partialorder %v244, 1.0
    %vm662 = vcmp.lt.f32.partialorder %v246, 1.0
    %vm663 = vcmp.lt.f32.partialorder %v248, 1.0
    %vm664 = vcmp.lt.f32.partialorder %v250, 1.0
    %vm665 = vcmp.lt.f32.partialorder %v252, 1.0
    %vm666 = vcmp.lt.f32.partialorder %v254, 1.0
    %vm667 = vcmp.lt.f32.partialorder %v256, 1.0
    %vm668 = vcmp.lt.f32.partialorder %v258, 1.0
    %vm669 = vcmp.lt.f32.partialorder %v260, 1.0
    %vm670 = vcmp.lt.f32.partialorder %v262, 1.0
    %vm671 = vcmp.lt.f32.partialorder %v264, 1.0
    %vm672 = vcmp.lt.f32.partialorder %v266, 1.0
    %vm673 = vcmp.lt.f32.partialorder %v268, 1.0
    %vm674 = vcmp.lt.f32.partialorder %v270, 1.0
    %vm675 = vcmp.lt.f32.partialorder %v272, 1.0
    %vm676 = vcmp.lt.f32.partialorder %v274, 1.0
    %vm677 = vcmp.lt.f32.partialorder %v276, 1.0
    %vm678 = vcmp.lt.f32.partialorder %v278, 1.0
    %vm679 = vcmp.lt.f32.partialorder %v280, 1.0
    %vm680 = vcmp.lt.f32.partialorder %v282, 1.0
    %vm681 = vcmp.lt.f32.partialorder %v284, 1.0
    %vm682 = vcmp.lt.f32.partialorder %v286, 1.0
    %vm683 = vcmp.lt.f32.partialorder %v288, 1.0
    %vm684 = vcmp.lt.f32.partialorder %v290, 1.0
    %vm685 = vcmp.lt.f32.partialorder %v292, 1.0
    %vm686 = vcmp.lt.f32.partialorder %v294, 1.0
    %vm687 = vcmp.lt.f32.partialorder %v296, 1.0
    %vm688 = vcmp.lt.f32.partialorder %v298, 1.0
    %vm689 = vcmp.lt.f32.partialorder %v300, 1.0
    %vm690 = vcmp.lt.f32.partialorder %v302, 1.0
    %vm691 = vcmp.lt.f32.partialorder %v304, 1.0
    %vm692 = vcmp.lt.f32.partialorder %v306, 1.0
    %vm693 = vcmp.lt.f32.partialorder %v308, 1.0
    %vm694 = vcmp.lt.f32.partialorder %v310, 1.0
    %vm695 = vcmp.lt.f32.partialorder %v312, 1.0
    %vm696 = vcmp.lt.f32.partialorder %v314, 1.0
    %vm697 = vcmp.lt.f32.partialorder %v316, 1.0
    %vm698 = vcmp.lt.f32.partialorder %v318, 1.0
    %v699 = vsel %vm661, %v623, 0.0
    %v700 = vsel %vm662, %v624, 0.0
    %v701 = vsel %vm663, %v625, 0.0
    %v702 = vsel %vm664, %v626, 0.0
    %v703 = vsel %vm665, %v627, 0.0
    %v704 = vsel %vm666, %v628, 0.0
    %v705 = vsel %vm667, %v629, 0.0
    %v706 = vsel %vm668, %v630, 0.0
    %v707 = vsel %vm669, %v631, 0.0
    %v708 = vsel %vm670, %v632, 0.0
    %v709 = vsel %vm671, %v633, 0.0
    %v710 = vsel %vm672, %v634, 0.0
    %v711 = vsel %vm673, %v635, 0.0
    %v712 = vsel %vm674, %v636, 0.0
    %v713 = vsel %vm675, %v637, 0.0
    %v714 = vsel %vm676, %v638, 0.0
    %v715 = vsel %vm677, %v639, 0.0
    %v716 = vsel %vm678, %v640, 0.0
    %v717 = vsel %vm679, %v641, 0.0
    %v718 = vsel %vm680, %v642, 0.0
    %v719 = vsel %vm681, %v643, 0.0
    %v720 = vsel %vm682, %v644, 0.0
    %v721 = vsel %vm683, %v645, 0.0
    %v722 = vsel %vm684, %v646, 0.0
    %v723 = vsel %vm685, %v647, 0.0
    %v724 = vsel %vm686, %v648, 0.0
    %v725 = vsel %vm687, %v649, 0.0
    %v726 = vsel %vm688, %v650, 0.0
    %v727 = vsel %vm689, %v651, 0.0
    %v728 = vsel %vm690, %v652, 0.0
    %v729 = vsel %vm691, %v653, 0.0
    %v730 = vsel %vm692, %v654, 0.0
    %v731 = vsel %vm693, %v655, 0.0
    %v732 = vsel %vm694, %v656, 0.0
    %v733 = vsel %vm695, %v657, 0.0
    %v734 = vsel %vm696, %v658, 0.0
    %v735 = vsel %vm697, %v659, 0.0
    %v736 = vsel %vm698, %v660, 0.0
    %v737 = vld [vmem:[%s1] sm:$0x1]
    %v738 = vld [vmem:[%s2] sm:$0x1]
    %740 = vset.pattern.permute.xlu0 0
    %741 = vperm.xlu0 %740, %v244
    %v742 = vpop.permute.xlu0 %741
    %745 = vset.pattern.permute.xlu0 0
    %746 = vperm.xlu0 %745, %v246
    %v747 = vpop.permute.xlu0 %746
    %750 = vset.pattern.permute.xlu0 0
    %751 = vperm.xlu0 %750, %v248
    %v752 = vpop.permute.xlu0 %751
    %755 = vset.pattern.permute.xlu0 0
    %756 = vperm.xlu0 %755, %v250
    %v757 = vpop.permute.xlu0 %756
    %760 = vset.pattern.permute.xlu0 0
    %761 = vperm.xlu0 %760, %v252
    %v762 = vpop.permute.xlu0 %761
    %765 = vset.pattern.permute.xlu0 0
    %766 = vperm.xlu0 %765, %v254
    %v767 = vpop.permute.xlu0 %766
    %770 = vset.pattern.permute.xlu0 0
    %771 = vperm.xlu0 %770, %v256
    %v772 = vpop.permute.xlu0 %771
    %775 = vset.pattern.permute.xlu0 0
    %776 = vperm.xlu0 %775, %v258
    %v777 = vpop.permute.xlu0 %776
    %780 = vset.pattern.permute.xlu0 0
    %781 = vperm.xlu0 %780, %v260
    %v782 = vpop.permute.xlu0 %781
    %785 = vset.pattern.permute.xlu0 0
    %786 = vperm.xlu0 %785, %v262
    %v787 = vpop.permute.xlu0 %786
    %790 = vset.pattern.permute.xlu0 0
    %791 = vperm.xlu0 %790, %v264
    %v792 = vpop.permute.xlu0 %791
    %795 = vset.pattern.permute.xlu0 0
    %796 = vperm.xlu0 %795, %v266
    %v797 = vpop.permute.xlu0 %796
    %800 = vset.pattern.permute.xlu0 0
    %801 = vperm.xlu0 %800, %v268
    %v802 = vpop.permute.xlu0 %801
    %805 = vset.pattern.permute.xlu0 0
    %806 = vperm.xlu0 %805, %v270
    %v807 = vpop.permute.xlu0 %806
    %810 = vset.pattern.permute.xlu0 0
    %811 = vperm.xlu0 %810, %v272
    %v812 = vpop.permute.xlu0 %811
    %815 = vset.pattern.permute.xlu0 0
    %816 = vperm.xlu0 %815, %v274
    %v817 = vpop.permute.xlu0 %816
    %820 = vset.pattern.permute.xlu0 0
    %821 = vperm.xlu0 %820, %v276
    %v822 = vpop.permute.xlu0 %821
    %825 = vset.pattern.permute.xlu0 0
    %826 = vperm.xlu0 %825, %v278
    %v827 = vpop.permute.xlu0 %826
    %830 = vset.pattern.permute.xlu0 0
    %831 = vperm.xlu0 %830, %v280
    %v832 = vpop.permute.xlu0 %831
    %835 = vset.pattern.permute.xlu0 0
    %836 = vperm.xlu0 %835, %v282
    %v837 = vpop.permute.xlu0 %836
    %840 = vset.pattern.permute.xlu0 0
    %841 = vperm.xlu0 %840, %v284
    %v842 = vpop.permute.xlu0 %841
    %845 = vset.pattern.permute.xlu0 0
    %846 = vperm.xlu0 %845, %v286
    %v847 = vpop.permute.xlu0 %846
    %850 = vset.pattern.permute.xlu0 0
    %851 = vperm.xlu0 %850, %v288
    %v852 = vpop.permute.xlu0 %851
    %855 = vset.pattern.permute.xlu0 0
    %856 = vperm.xlu0 %855, %v290
    %v857 = vpop.permute.xlu0 %856
    %860 = vset.pattern.permute.xlu0 0
    %861 = vperm.xlu0 %860, %v292
    %v862 = vpop.permute.xlu0 %861
    %865 = vset.pattern.permute.xlu0 0
    %866 = vperm.xlu0 %865, %v294
    %v867 = vpop.permute.xlu0 %866
    %870 = vset.pattern.permute.xlu0 0
    %871 = vperm.xlu0 %870, %v296
    %v872 = vpop.permute.xlu0 %871
    %875 = vset.pattern.permute.xlu0 0
    %876 = vperm.xlu0 %875, %v298
    %v877 = vpop.permute.xlu0 %876
    %880 = vset.pattern.permute.xlu0 0
    %881 = vperm.xlu0 %880, %v300
    %v882 = vpop.permute.xlu0 %881
    %885 = vset.pattern.permute.xlu0 0
    %886 = vperm.xlu0 %885, %v302
    %v887 = vpop.permute.xlu0 %886
    %890 = vset.pattern.permute.xlu0 0
    %891 = vperm.xlu0 %890, %v304
    %v892 = vpop.permute.xlu0 %891
    %895 = vset.pattern.permute.xlu0 0
    %896 = vperm.xlu0 %895, %v306
    %v897 = vpop.permute.xlu0 %896
    %900 = vset.pattern.permute.xlu0 0
    %901 = vperm.xlu0 %900, %v308
    %v902 = vpop.permute.xlu0 %901
    %905 = vset.pattern.permute.xlu0 0
    %906 = vperm.xlu0 %905, %v310
    %v907 = vpop.permute.xlu0 %906
    %910 = vset.pattern.permute.xlu0 0
    %911 = vperm.xlu0 %910, %v312
    %v912 = vpop.permute.xlu0 %911
    %915 = vset.pattern.permute.xlu0 0
    %916 = vperm.xlu0 %915, %v314
    %v917 = vpop.permute.xlu0 %916
    %920 = vset.pattern.permute.xlu0 0
    %921 = vperm.xlu0 %920, %v316
    %v922 = vpop.permute.xlu0 %921
    %925 = vset.pattern.permute.xlu0 0
    %926 = vperm.xlu0 %925, %v318
    %v927 = vpop.permute.xlu0 %926
    %v930 = vlaneseq
    %v931 = vshrl.u32 %v930, 7
    %v932 = vsub.s32 0, %v931
    %v933 = vrot.slane %v737, %v932
    %v935 = vsub.f32 %v742, %v933
    %v936 = vsub.f32 %v747, %v933
    %v937 = vsub.f32 %v752, %v933
    %v938 = vsub.f32 %v757, %v933
    %v939 = vsub.f32 %v762, %v933
    %v940 = vsub.f32 %v767, %v933
    %v941 = vsub.f32 %v772, %v933
    %v942 = vsub.f32 %v777, %v933
    %v943 = vsub.f32 %v782, %v933
    %v944 = vsub.f32 %v787, %v933
    %v945 = vsub.f32 %v792, %v933
    %v946 = vsub.f32 %v797, %v933
    %v947 = vsub.f32 %v802, %v933
    %v948 = vsub.f32 %v807, %v933
    %v949 = vsub.f32 %v812, %v933
    %v950 = vsub.f32 %v817, %v933
    %v951 = vsub.f32 %v822, %v933
    %v952 = vsub.f32 %v827, %v933
    %v953 = vsub.f32 %v832, %v933
    %v954 = vsub.f32 %v837, %v933
    %v955 = vsub.f32 %v842, %v933
    %v956 = vsub.f32 %v847, %v933
    %v957 = vsub.f32 %v852, %v933
    %v958 = vsub.f32 %v857, %v933
    %v959 = vsub.f32 %v862, %v933
    %v960 = vsub.f32 %v867, %v933
    %v961 = vsub.f32 %v872, %v933
    %v962 = vsub.f32 %v877, %v933
    %v963 = vsub.f32 %v882, %v933
    %v964 = vsub.f32 %v887, %v933
    %v965 = vsub.f32 %v892, %v933
    %v966 = vsub.f32 %v897, %v933
    %v967 = vsub.f32 %v902, %v933
    %v968 = vsub.f32 %v907, %v933
    %v969 = vsub.f32 %v912, %v933
    %v970 = vsub.f32 %v917, %v933
    %v971 = vsub.f32 %v922, %v933
    %v972 = vsub.f32 %v927, %v933
    %v973 = vmul.f32 %v935, %v935
    %v974 = vmul.f32 %v936, %v936
    %v975 = vmul.f32 %v937, %v937
    %v976 = vmul.f32 %v938, %v938
    %v977 = vmul.f32 %v939, %v939
    %v978 = vmul.f32 %v940, %v940
    %v979 = vmul.f32 %v941, %v941
    %v980 = vmul.f32 %v942, %v942
    %v981 = vmul.f32 %v943, %v943
    %v982 = vmul.f32 %v944, %v944
    %v983 = vmul.f32 %v945, %v945
    %v984 = vmul.f32 %v946, %v946
    %v985 = vmul.f32 %v947, %v947
    %v986 = vmul.f32 %v948, %v948
    %v987 = vmul.f32 %v949, %v949
    %v988 = vmul.f32 %v950, %v950
    %v989 = vmul.f32 %v951, %v951
    %v990 = vmul.f32 %v952, %v952
    %v991 = vmul.f32 %v953, %v953
    %v992 = vmul.f32 %v954, %v954
    %v993 = vmul.f32 %v955, %v955
    %v994 = vmul.f32 %v956, %v956
    %v995 = vmul.f32 %v957, %v957
    %v996 = vmul.f32 %v958, %v958
    %v997 = vmul.f32 %v959, %v959
    %v998 = vmul.f32 %v960, %v960
    %v999 = vmul.f32 %v961, %v961
    %v1000 = vmul.f32 %v962, %v962
    %v1001 = vmul.f32 %v963, %v963
    %v1002 = vmul.f32 %v964, %v964
    %v1003 = vmul.f32 %v965, %v965
    %v1004 = vmul.f32 %v966, %v966
    %v1005 = vmul.f32 %v967, %v967
    %v1006 = vmul.f32 %v968, %v968
    %v1007 = vmul.f32 %v969, %v969
    %v1008 = vmul.f32 %v970, %v970
    %v1009 = vmul.f32 %v971, %v971
    %v1010 = vmul.f32 %v972, %v972
    %v1012 = vlaneseq
    %v1013 = vshrl.u32 %v1012, 7
    %v1014 = vsub.s32 0, %v1013
    %v1015 = vrot.slane %v738, %v1014
    %v1017 = vmul.f32 %v973, %v1015
    %v1018 = vmul.f32 %v974, %v1015
    %v1019 = vmul.f32 %v975, %v1015
    %v1020 = vmul.f32 %v976, %v1015
    %v1021 = vmul.f32 %v977, %v1015
    %v1022 = vmul.f32 %v978, %v1015
    %v1023 = vmul.f32 %v979, %v1015
    %v1024 = vmul.f32 %v980, %v1015
    %v1025 = vmul.f32 %v981, %v1015
    %v1026 = vmul.f32 %v982, %v1015
    %v1027 = vmul.f32 %v983, %v1015
    %v1028 = vmul.f32 %v984, %v1015
    %v1029 = vmul.f32 %v985, %v1015
    %v1030 = vmul.f32 %v986, %v1015
    %v1031 = vmul.f32 %v987, %v1015
    %v1032 = vmul.f32 %v988, %v1015
    %v1033 = vmul.f32 %v989, %v1015
    %v1034 = vmul.f32 %v990, %v1015
    %v1035 = vmul.f32 %v991, %v1015
    %v1036 = vmul.f32 %v992, %v1015
    %v1037 = vmul.f32 %v993, %v1015
    %v1038 = vmul.f32 %v994, %v1015
    %v1039 = vmul.f32 %v995, %v1015
    %v1040 = vmul.f32 %v996, %v1015
    %v1041 = vmul.f32 %v997, %v1015
    %v1042 = vmul.f32 %v998, %v1015
    %v1043 = vmul.f32 %v999, %v1015
    %v1044 = vmul.f32 %v1000, %v1015
    %v1045 = vmul.f32 %v1001, %v1015
    %v1046 = vmul.f32 %v1002, %v1015
    %v1047 = vmul.f32 %v1003, %v1015
    %v1048 = vmul.f32 %v1004, %v1015
    %v1049 = vmul.f32 %v1005, %v1015
    %v1050 = vmul.f32 %v1006, %v1015
    %v1051 = vmul.f32 %v1007, %v1015
    %v1052 = vmul.f32 %v1008, %v1015
    %v1053 = vmul.f32 %v1009, %v1015
    %v1054 = vmul.f32 %v1010, %v1015
    %v1055 = vmul.f32 %v1017, 1.442695
    %v1056 = vpow.pop %v1055
    %v1057 = vmul.f32 %v1018, 1.442695
    %v1058 = vpow.pop %v1057
    %v1059 = vmul.f32 %v1019, 1.442695
    %v1060 = vpow.pop %v1059
    %v1061 = vmul.f32 %v1020, 1.442695
    %v1062 = vpow.pop %v1061
    %v1063 = vmul.f32 %v1021, 1.442695
    %v1064 = vpow.pop %v1063
    %v1065 = vmul.f32 %v1022, 1.442695
    %v1066 = vpow.pop %v1065
    %v1067 = vmul.f32 %v1023, 1.442695
    %v1068 = vpow.pop %v1067
    %v1069 = vmul.f32 %v1024, 1.442695
    %v1070 = vpow.pop %v1069
    %v1071 = vmul.f32 %v1025, 1.442695
    %v1072 = vpow.pop %v1071
    %v1073 = vmul.f32 %v1026, 1.442695
    %v1074 = vpow.pop %v1073
    %v1075 = vmul.f32 %v1027, 1.442695
    %v1076 = vpow.pop %v1075
    %v1077 = vmul.f32 %v1028, 1.442695
    %v1078 = vpow.pop %v1077
    %v1079 = vmul.f32 %v1029, 1.442695
    %v1080 = vpow.pop %v1079
    %v1081 = vmul.f32 %v1030, 1.442695
    %v1082 = vpow.pop %v1081
    %v1083 = vmul.f32 %v1031, 1.442695
    %v1084 = vpow.pop %v1083
    %v1085 = vmul.f32 %v1032, 1.442695
    %v1086 = vpow.pop %v1085
    %v1087 = vmul.f32 %v1033, 1.442695
    %v1088 = vpow.pop %v1087
    %v1089 = vmul.f32 %v1034, 1.442695
    %v1090 = vpow.pop %v1089
    %v1091 = vmul.f32 %v1035, 1.442695
    %v1092 = vpow.pop %v1091
    %v1093 = vmul.f32 %v1036, 1.442695
    %v1094 = vpow.pop %v1093
    %v1095 = vmul.f32 %v1037, 1.442695
    %v1096 = vpow.pop %v1095
    %v1097 = vmul.f32 %v1038, 1.442695
    %v1098 = vpow.pop %v1097
    %v1099 = vmul.f32 %v1039, 1.442695
    %v1100 = vpow.pop %v1099
    %v1101 = vmul.f32 %v1040, 1.442695
    %v1102 = vpow.pop %v1101
    %v1103 = vmul.f32 %v1041, 1.442695
    %v1104 = vpow.pop %v1103
    %v1105 = vmul.f32 %v1042, 1.442695
    %v1106 = vpow.pop %v1105
    %v1107 = vmul.f32 %v1043, 1.442695
    %v1108 = vpow.pop %v1107
    %v1109 = vmul.f32 %v1044, 1.442695
    %v1110 = vpow.pop %v1109
    %v1111 = vmul.f32 %v1045, 1.442695
    %v1112 = vpow.pop %v1111
    %v1113 = vmul.f32 %v1046, 1.442695
    %v1114 = vpow.pop %v1113
    %v1115 = vmul.f32 %v1047, 1.442695
    %v1116 = vpow.pop %v1115
    %v1117 = vmul.f32 %v1048, 1.442695
    %v1118 = vpow.pop %v1117
    %v1119 = vmul.f32 %v1049, 1.442695
    %v1120 = vpow.pop %v1119
    %v1121 = vmul.f32 %v1050, 1.442695
    %v1122 = vpow.pop %v1121
    %v1123 = vmul.f32 %v1051, 1.442695
    %v1124 = vpow.pop %v1123
    %v1125 = vmul.f32 %v1052, 1.442695
    %v1126 = vpow.pop %v1125
    %v1127 = vmul.f32 %v1053, 1.442695
    %v1128 = vpow.pop %v1127
    %v1129 = vmul.f32 %v1054, 1.442695
    %v1130 = vpow.pop %v1129
    %1132 = vset.pattern.permute.xlu0 0
    %1133 = vperm.xlu0 %1132, %v699
    %v1134 = vpop.permute.xlu0 %1133
    %1137 = vset.pattern.permute.xlu0 0
    %1138 = vperm.xlu0 %1137, %v700
    %v1139 = vpop.permute.xlu0 %1138
    %1142 = vset.pattern.permute.xlu0 0
    %1143 = vperm.xlu0 %1142, %v701
    %v1144 = vpop.permute.xlu0 %1143
    %1147 = vset.pattern.permute.xlu0 0
    %1148 = vperm.xlu0 %1147, %v702
    %v1149 = vpop.permute.xlu0 %1148
    %1152 = vset.pattern.permute.xlu0 0
    %1153 = vperm.xlu0 %1152, %v703
    %v1154 = vpop.permute.xlu0 %1153
    %1157 = vset.pattern.permute.xlu0 0
    %1158 = vperm.xlu0 %1157, %v704
    %v1159 = vpop.permute.xlu0 %1158
    %1162 = vset.pattern.permute.xlu0 0
    %1163 = vperm.xlu0 %1162, %v705
    %v1164 = vpop.permute.xlu0 %1163
    %1167 = vset.pattern.permute.xlu0 0
    %1168 = vperm.xlu0 %1167, %v706
    %v1169 = vpop.permute.xlu0 %1168
    %1172 = vset.pattern.permute.xlu0 0
    %1173 = vperm.xlu0 %1172, %v707
    %v1174 = vpop.permute.xlu0 %1173
    %1177 = vset.pattern.permute.xlu0 0
    %1178 = vperm.xlu0 %1177, %v708
    %v1179 = vpop.permute.xlu0 %1178
    %1182 = vset.pattern.permute.xlu0 0
    %1183 = vperm.xlu0 %1182, %v709
    %v1184 = vpop.permute.xlu0 %1183
    %1187 = vset.pattern.permute.xlu0 0
    %1188 = vperm.xlu0 %1187, %v710
    %v1189 = vpop.permute.xlu0 %1188
    %1192 = vset.pattern.permute.xlu0 0
    %1193 = vperm.xlu0 %1192, %v711
    %v1194 = vpop.permute.xlu0 %1193
    %1197 = vset.pattern.permute.xlu0 0
    %1198 = vperm.xlu0 %1197, %v712
    %v1199 = vpop.permute.xlu0 %1198
    %1202 = vset.pattern.permute.xlu0 0
    %1203 = vperm.xlu0 %1202, %v713
    %v1204 = vpop.permute.xlu0 %1203
    %1207 = vset.pattern.permute.xlu0 0
    %1208 = vperm.xlu0 %1207, %v714
    %v1209 = vpop.permute.xlu0 %1208
    %1212 = vset.pattern.permute.xlu0 0
    %1213 = vperm.xlu0 %1212, %v715
    %v1214 = vpop.permute.xlu0 %1213
    %1217 = vset.pattern.permute.xlu0 0
    %1218 = vperm.xlu0 %1217, %v716
    %v1219 = vpop.permute.xlu0 %1218
    %1222 = vset.pattern.permute.xlu0 0
    %1223 = vperm.xlu0 %1222, %v717
    %v1224 = vpop.permute.xlu0 %1223
    %1227 = vset.pattern.permute.xlu0 0
    %1228 = vperm.xlu0 %1227, %v718
    %v1229 = vpop.permute.xlu0 %1228
    %1232 = vset.pattern.permute.xlu0 0
    %1233 = vperm.xlu0 %1232, %v719
    %v1234 = vpop.permute.xlu0 %1233
    %1237 = vset.pattern.permute.xlu0 0
    %1238 = vperm.xlu0 %1237, %v720
    %v1239 = vpop.permute.xlu0 %1238
    %1242 = vset.pattern.permute.xlu0 0
    %1243 = vperm.xlu0 %1242, %v721
    %v1244 = vpop.permute.xlu0 %1243
    %1247 = vset.pattern.permute.xlu0 0
    %1248 = vperm.xlu0 %1247, %v722
    %v1249 = vpop.permute.xlu0 %1248
    %1252 = vset.pattern.permute.xlu0 0
    %1253 = vperm.xlu0 %1252, %v723
    %v1254 = vpop.permute.xlu0 %1253
    %1257 = vset.pattern.permute.xlu0 0
    %1258 = vperm.xlu0 %1257, %v724
    %v1259 = vpop.permute.xlu0 %1258
    %1262 = vset.pattern.permute.xlu0 0
    %1263 = vperm.xlu0 %1262, %v725
    %v1264 = vpop.permute.xlu0 %1263
    %1267 = vset.pattern.permute.xlu0 0
    %1268 = vperm.xlu0 %1267, %v726
    %v1269 = vpop.permute.xlu0 %1268
    %1272 = vset.pattern.permute.xlu0 0
    %1273 = vperm.xlu0 %1272, %v727
    %v1274 = vpop.permute.xlu0 %1273
    %1277 = vset.pattern.permute.xlu0 0
    %1278 = vperm.xlu0 %1277, %v728
    %v1279 = vpop.permute.xlu0 %1278
    %1282 = vset.pattern.permute.xlu0 0
    %1283 = vperm.xlu0 %1282, %v729
    %v1284 = vpop.permute.xlu0 %1283
    %1287 = vset.pattern.permute.xlu0 0
    %1288 = vperm.xlu0 %1287, %v730
    %v1289 = vpop.permute.xlu0 %1288
    %1292 = vset.pattern.permute.xlu0 0
    %1293 = vperm.xlu0 %1292, %v731
    %v1294 = vpop.permute.xlu0 %1293
    %1297 = vset.pattern.permute.xlu0 0
    %1298 = vperm.xlu0 %1297, %v732
    %v1299 = vpop.permute.xlu0 %1298
    %1302 = vset.pattern.permute.xlu0 0
    %1303 = vperm.xlu0 %1302, %v733
    %v1304 = vpop.permute.xlu0 %1303
    %1307 = vset.pattern.permute.xlu0 0
    %1308 = vperm.xlu0 %1307, %v734
    %v1309 = vpop.permute.xlu0 %1308
    %1312 = vset.pattern.permute.xlu0 0
    %1313 = vperm.xlu0 %1312, %v735
    %v1314 = vpop.permute.xlu0 %1313
    %1317 = vset.pattern.permute.xlu0 0
    %1318 = vperm.xlu0 %1317, %v736
    %v1319 = vpop.permute.xlu0 %1318
    %v1321 = vmul.f32 %v1134, %v1056
    %v1322 = vmul.f32 %v1139, %v1058
    %v1323 = vmul.f32 %v1144, %v1060
    %v1324 = vmul.f32 %v1149, %v1062
    %v1325 = vmul.f32 %v1154, %v1064
    %v1326 = vmul.f32 %v1159, %v1066
    %v1327 = vmul.f32 %v1164, %v1068
    %v1328 = vmul.f32 %v1169, %v1070
    %v1329 = vmul.f32 %v1174, %v1072
    %v1330 = vmul.f32 %v1179, %v1074
    %v1331 = vmul.f32 %v1184, %v1076
    %v1332 = vmul.f32 %v1189, %v1078
    %v1333 = vmul.f32 %v1194, %v1080
    %v1334 = vmul.f32 %v1199, %v1082
    %v1335 = vmul.f32 %v1204, %v1084
    %v1336 = vmul.f32 %v1209, %v1086
    %v1337 = vmul.f32 %v1214, %v1088
    %v1338 = vmul.f32 %v1219, %v1090
    %v1339 = vmul.f32 %v1224, %v1092
    %v1340 = vmul.f32 %v1229, %v1094
    %v1341 = vmul.f32 %v1234, %v1096
    %v1342 = vmul.f32 %v1239, %v1098
    %v1343 = vmul.f32 %v1244, %v1100
    %v1344 = vmul.f32 %v1249, %v1102
    %v1345 = vmul.f32 %v1254, %v1104
    %v1346 = vmul.f32 %v1259, %v1106
    %v1347 = vmul.f32 %v1264, %v1108
    %v1348 = vmul.f32 %v1269, %v1110
    %v1349 = vmul.f32 %v1274, %v1112
    %v1350 = vmul.f32 %v1279, %v1114
    %v1351 = vmul.f32 %v1284, %v1116
    %v1352 = vmul.f32 %v1289, %v1118
    %v1353 = vmul.f32 %v1294, %v1120
    %v1354 = vmul.f32 %v1299, %v1122
    %v1355 = vmul.f32 %v1304, %v1124
    %v1356 = vmul.f32 %v1309, %v1126
    %v1357 = vmul.f32 %v1314, %v1128
    %v1358 = vmul.f32 %v1319, %v1130
    %1359 = vst [vmem:[#allocation2] sm:$0xff] %v1321
    %1360 = vst [vmem:[#allocation2 + $0x8] sm:$0xff] %v1322
    %1361 = vst [vmem:[#allocation2 + $0x10] sm:$0xff] %v1323
    %1362 = vst [vmem:[#allocation2 + $0x18] sm:$0xff] %v1324
    %1363 = vst [vmem:[#allocation2 + $0x20] sm:$0xff] %v1325
    %1364 = vst [vmem:[#allocation2 + $0x28] sm:$0xff] %v1326
    %1365 = vst [vmem:[#allocation2 + $0x30] sm:$0xff] %v1327
    %1366 = vst [vmem:[#allocation2 + $0x38] sm:$0xff] %v1328
    %1367 = vst [vmem:[#allocation2 + $0x40] sm:$0xff] %v1329
    %1368 = vst [vmem:[#allocation2 + $0x48] sm:$0xff] %v1330
    %1369 = vst [vmem:[#allocation2 + $0x50] sm:$0xff] %v1331
    %1370 = vst [vmem:[#allocation2 + $0x58] sm:$0xff] %v1332
    %1371 = vst [vmem:[#allocation2 + $0x60] sm:$0xff] %v1333
    %1372 = vst [vmem:[#allocation2 + $0x68] sm:$0xff] %v1334
    %1373 = vst [vmem:[#allocation2 + $0x70] sm:$0xff] %v1335
    %1374 = vst [vmem:[#allocation2 + $0x78] sm:$0xff] %v1336
    %1375 = vst [vmem:[#allocation2 + $0x80] sm:$0xff] %v1337
    %1376 = vst [vmem:[#allocation2 + $0x88] sm:$0xff] %v1338
    %1377 = vst [vmem:[#allocation2 + $0x90] sm:$0xff] %v1339
    %1378 = vst [vmem:[#allocation2 + $0x98] sm:$0xff] %v1340
    %1379 = vst [vmem:[#allocation2 + $0xa0] sm:$0xff] %v1341
    %1380 = vst [vmem:[#allocation2 + $0xa8] sm:$0xff] %v1342
    %1381 = vst [vmem:[#allocation2 + $0xb0] sm:$0xff] %v1343
    %1382 = vst [vmem:[#allocation2 + $0xb8] sm:$0xff] %v1344
    %1383 = vst [vmem:[#allocation2 + $0xc0] sm:$0xff] %v1345
    %1384 = vst [vmem:[#allocation2 + $0xc8] sm:$0xff] %v1346
    %1385 = vst [vmem:[#allocation2 + $0xd0] sm:$0xff] %v1347
    %1386 = vst [vmem:[#allocation2 + $0xd8] sm:$0xff] %v1348
    %1387 = vst [vmem:[#allocation2 + $0xe0] sm:$0xff] %v1349
    %1388 = vst [vmem:[#allocation2 + $0xe8] sm:$0xff] %v1350
    %1389 = vst [vmem:[#allocation2 + $0xf0] sm:$0xff] %v1351
    %1390 = vst [vmem:[#allocation2 + $0xf8] sm:$0xff] %v1352
    %1391 = vst [vmem:[#allocation2 + $0x100] sm:$0xff] %v1353
    %1392 = vst [vmem:[#allocation2 + $0x108] sm:$0xff] %v1354
    %1393 = vst [vmem:[#allocation2 + $0x110] sm:$0xff] %v1355
    %1394 = vst [vmem:[#allocation2 + $0x118] sm:$0xff] %v1356
    %1395 = vst [vmem:[#allocation2 + $0x120] sm:$0xff] %v1357
    %1396 = vst [vmem:[#allocation2 + $0x128] sm:$0xff] %v1358
    // Predicated region
    $region14: #{tpu_custom_call.1} parent=1 // pred_check
      _
    $region15: #{tpu_custom_call.1} parent=1 // pred_check_branch
      %1398 = sbr.rel (0) target = $region17
    $region16: #{tpu_custom_call.1} parent=1 // pred_region
      %s1400 = ssub.s32 4864, 4864
      %1401 = vsyncadd [#allocation3], %s1400
      %s1402 = sshll.u32 [#allocation2], 4
      %s1403 = int_to_ptr.vmem [resolvable:$true] %s1402
      %1408 = dma.vmem_to_hbm [thread:$0]  %s1403, 4864, %s3, [#allocation3], 128, 128, 8
    $region17: #{tpu_custom_call.1} parent=1 // pred_fallthru
      _
    // Predicated region
    $region18: #{tpu_custom_call.1} parent=1 // pred_check
      _
    $region19: #{tpu_custom_call.1} parent=1 // pred_check_branch
      %1410 = sbr.rel (0) target = $region21
    $region20: #{tpu_custom_call.1} parent=1 // pred_region
      %1411 = dma.done [#allocation3], 4864
    $region21: #{tpu_custom_call.1} parent=1 // pred_fallthru
      _
    %1412 = vsyncpa [#allocation3], 1

</llo_original>
